<compile_context>
chip_gen: v5e
topology: v5e:2x2
jax: 0.10.0
libtpu: 0.0.40
codegen_flags: <defaults>
</compile_context>

<pallas_src>
import functools
import math

import jax
import jax.numpy as jnp
from jax.experimental import pallas as pl
from jax.experimental.pallas import tpu as pltpu


def _round_up(x, m):
    return ((x + m - 1) // m) * m


def _compiler_params(tile_bytes, semantics):
    vmem_limit = min(64 << 20, max(16 << 20, int(tile_bytes) + (4 << 20)))
    return pltpu.CompilerParams(dimension_semantics=semantics,
                                vmem_limit_bytes=vmem_limit)


# ---------------------------------------------------------------------------
# Projection pass:  y = x @ w_t + b   (w_t already (in, out); all dims lane-dense)
# ---------------------------------------------------------------------------
def _linear_kernel(x_ref, w_ref, b_ref, o_ref):
    o_ref[...] = (jnp.dot(x_ref[...], w_ref[...],
                          preferred_element_type=jnp.float32)
                  + b_ref[...]).astype(o_ref.dtype)


def _linear(x, w_t, b, block_r):
    n_r, d_in = x.shape
    d_out = w_t.shape[1]
    grid = (n_r // block_r,)
    tile_bytes = 2 * 4 * (block_r * d_in + d_in * d_out + d_out + block_r * d_out)
    return pl.pallas_call(
        _linear_kernel,
        out_shape=jax.ShapeDtypeStruct((n_r, d_out), jnp.float32),
        grid_spec=pltpu.PrefetchScalarGridSpec(
            num_scalar_prefetch=0,
            grid=grid,
            in_specs=[pl.BlockSpec((block_r, d_in), lambda i: (i, 0)),
                      pl.BlockSpec((d_in, d_out), lambda i: (0, 0)),
                      pl.BlockSpec((1, d_out), lambda i: (0, 0))],
            out_specs=pl.BlockSpec((block_r, d_out), lambda i: (i, 0)),
        ),
        compiler_params=_compiler_params(tile_bytes, ("parallel",)),
        cost_estimate=pl.CostEstimate(
            flops=2 * n_r * d_in * d_out,
            transcendentals=0,
            bytes_accessed=4 * (n_r * d_in + d_in * d_out + d_out + n_r * d_out)),
    )(x, w_t, b)


# ---------------------------------------------------------------------------
# Flash-style attention over projected (padded) query / key / value
# ---------------------------------------------------------------------------
def _flash_attn_kernel(q_ref, k_ref, v_ref, o_ref, m_sc, l_sc, acc_sc,
                       *, n_k, block_k):
    kj = pl.program_id(1)

    @pl.when(kj == 0)
    def _init():
        m_sc[...] = jnp.full_like(m_sc, -jnp.inf)
        l_sc[...] = jnp.zeros_like(l_sc)
        acc_sc[...] = jnp.zeros_like(acc_sc)

    # Scores: contract on the last dim of both operands -> no transpose needed.
    # (1/sqrt(A) is already folded into the query projection weights/bias.)
    s = jax.lax.dot_general(q_ref[...], k_ref[...],
                            dimension_numbers=(((1,), (1,)), ((), ())),
                            preferred_element_type=jnp.float32)

    # Mask padded key rows so no softmax mass leaks to padding.
    col = kj * block_k + jax.lax.broadcasted_iota(jnp.int32, s.shape, 1)
    s = jnp.where(col < n_k, s, -1e30)

    m_prev = m_sc[...]
    m_new = jnp.maximum(m_prev, jnp.max(s, axis=-1, keepdims=True))
    alpha = jnp.exp(m_prev - m_new)
    p = jnp.exp(s - m_new)
    l_sc[...] = alpha * l_sc[...] + jnp.sum(p, axis=-1, keepdims=True)
    acc_sc[...] = alpha * acc_sc[...] + jnp.dot(
        p.astype(v_ref.dtype), v_ref[...], preferred_element_type=jnp.float32)
    m_sc[...] = m_new

    @pl.when(kj == pl.num_programs(1) - 1)
    def _finalize():
        inv_l = pl.reciprocal(l_sc[...], approx=True)   # EUP vrcp slot, ~free
        o_ref[...] = (acc_sc[...] * inv_l).astype(o_ref.dtype)


def _flash_attention(query, key, value, n_k, block_q, block_k):
    n_q_pad, a_pad = query.shape
    n_k_pad = key.shape[0]
    dv_pad = value.shape[1]
    grid = (n_q_pad // block_q, n_k_pad // block_k)

    kernel = functools.partial(_flash_attn_kernel, n_k=n_k, block_k=block_k)
    tile_bytes = (2 * 4 * (block_q * a_pad + block_k * a_pad
                           + block_k * dv_pad + block_q * dv_pad)
                  + 4 * (block_q * dv_pad + 2 * block_q))
    return pl.pallas_call(
        kernel,
        out_shape=jax.ShapeDtypeStruct((n_q_pad, dv_pad), jnp.float32),
        grid_spec=pltpu.PrefetchScalarGridSpec(
            num_scalar_prefetch=0,
            grid=grid,
            in_specs=[pl.BlockSpec((block_q, a_pad), lambda i, j: (i, 0)),
                      pl.BlockSpec((block_k, a_pad), lambda i, j: (j, 0)),
                      pl.BlockSpec((block_k, dv_pad), lambda i, j: (j, 0))],
            out_specs=pl.BlockSpec((block_q, dv_pad), lambda i, j: (i, 0)),
            scratch_shapes=[pltpu.VMEM((block_q, 1), jnp.float32),
                            pltpu.VMEM((block_q, 1), jnp.float32),
                            pltpu.VMEM((block_q, dv_pad), jnp.float32)],
        ),
        compiler_params=_compiler_params(tile_bytes, ("parallel", "arbitrary")),
        cost_estimate=pl.CostEstimate(
            flops=2 * n_q_pad * n_k_pad * (a_pad + dv_pad),
            transcendentals=n_q_pad * n_k_pad,
            bytes_accessed=4 * (n_q_pad * a_pad + n_k_pad * a_pad
                                + n_k_pad * dv_pad + n_q_pad * dv_pad)),
    )(query, key, value)


# ---------------------------------------------------------------------------
# Public wrapper: pad / pre-transpose / fold scale on the host, run passes, slice.
# ---------------------------------------------------------------------------
@functools.partial(jax.jit, static_argnames=("attention_size",))
def single_head_attention(q, k, v, params, attention_size):
    wq, bq = params["wq"], params["bq"]
    wk, bk = params["wk"], params["bk"]
    wv, bv = params["wv"], params["bv"]

    n_q, query_size = q.shape
    n_k, key_size = k.shape
    value_size = wv.shape[0]

    # Lane-dense padded feature sizes (multiples of 128).
    dq_pad = _round_up(query_size, 128)
    dk_pad = _round_up(key_size, 128)
    a_pad = _round_up(attention_size, 128)
    dv_pad = _round_up(value_size, 128)

    # Row tiles (multiples of 8 sublanes); rows padded to a whole number of tiles.
    block_q = min(128, _round_up(n_q, 8))
    block_k = min(256, _round_up(n_k, 8))
    n_q_pad = _round_up(n_q, block_q)
    n_k_pad = _round_up(n_k, block_k)

    f32 = jnp.float32
    scale = 1.0 / math.sqrt(attention_size)

    def pad2(x, rows, cols):
        x = x.astype(f32)
        return jnp.pad(x, ((0, rows - x.shape[0]), (0, cols - x.shape[1])))

    # Transpose weights once to (in, out); fold softmax scale into the Q projection.
    wq_t = pad2((wq * scale).T, dq_pad, a_pad)
    bq_p = pad2(bq * scale, 1, a_pad)
    wk_t = pad2(wk.T, dk_pad, a_pad)
    bk_p = pad2(bk, 1, a_pad)
    wv_t = pad2(wv.T, dq_pad, dv_pad)
    bv_p = pad2(bv, 1, dv_pad)

    q_p = pad2(q, n_q_pad, dq_pad)
    k_p = pad2(k, n_k_pad, dk_pad)
    v_p = pad2(v, n_k_pad, dq_pad)   # dense_v consumes query_size features

    # Pass 1: projections (tiled over rows; never repeated per query block).
    query = _linear(q_p, wq_t, bq_p, block_q)
    key = _linear(k_p, wk_t, bk_p, block_k)
    value = _linear(v_p, wv_t, bv_p, block_k)

    # Pass 2: flash attention with online softmax over key blocks.
    out = _flash_attention(query, key, value, n_k, block_q, block_k)
    return out[:n_q, :value_size]


# ---------------------------------------------------------------------------
# Deterministic nn.Linear-style init and pure-JAX reference
# ---------------------------------------------------------------------------
def init_params(key, query_size, key_size, value_size, attention_size):
    ks = jax.random.split(key, 6)

    def linear(kw, kb, out_f, in_f):
        bound = 1.0 / math.sqrt(in_f)
        w = jax.random.uniform(kw, (out_f, in_f), jnp.float32, -bound, bound)
        b = jax.random.uniform(kb, (1, out_f), jnp.float32, -bound, bound)
        return w, b

    wq, bq = linear(ks[0], ks[1], attention_size, query_size)
    wk, bk = linear(ks[2], ks[3], attention_size, key_size)
    wv, bv = linear(ks[4], ks[5], value_size, query_size)
    return {"wq": wq, "bq": bq, "wk": wk, "bk": bk, "wv": wv, "bv": bv}


def reference_attention(q, k, v, params, attention_size):
    query = q @ params["wq"].T + params["bq"]
    key = k @ params["wk"].T + params["bk"]
    value = v @ params["wv"].T + params["bv"]
    g = (query @ key.T) / math.sqrt(attention_size)
    score = jax.nn.softmax(g, axis=-1)
    return jnp.sum(score[..., None] * value, axis=-2)


if __name__ == "__main__":
    def run_case(key, n_q, n_k, query_size, key_size, value_size, attention_size):
        k_params, k_q, k_k, k_v = jax.random.split(key, 4)
        params = init_params(k_params, query_size, key_size, value_size, attention_size)
        q = jax.random.normal(k_q, (n_q, query_size), jnp.float32)
        k = jax.random.normal(k_k, (n_k, key_size), jnp.float32)
        v = jax.random.normal(k_v, (n_k, query_size), jnp.float32)

        out = jax.block_until_ready(
            single_head_attention(q, k, v, params, attention_size=attention_size))
        ref = reference_attention(q, k, v, params, attention_size)
        assert out.shape == (n_q, value_size)
        # Tolerance slightly looser than 1e-4 to cover the EUP approximate reciprocal.
        err = float(jnp.max(jnp.abs(out - ref)))
        assert jnp.allclose(out, ref, atol=2e-3, rtol=2e-3), err

    root = jax.random.PRNGKey(0)
    key_a, key_b = jax.random.split(root)

    # Small aligned case (module defaults used previously).
    run_case(key_a, n_q=8, n_k=8, query_size=32, key_size=16,
             value_size=32, attention_size=32)
    # Non-aligned case exercising row/feature padding and padded-key masking.
    run_case(key_b, n_q=50, n_k=37, query_size=20, key_size=12,
             value_size=24, attention_size=16)

    print("KERNEL_OK")
</pallas_src>

<mosaic_0001>
module attributes {stable_mosaic.version = 11 : i64} {
  func.func @_linear_kernel(%arg0: i32, %arg1: memref<8x128xf32, #tpu.memory_space<vmem>>, %arg2: memref<128x128xf32, #tpu.memory_space<vmem>>, %arg3: memref<1x128xf32, #tpu.memory_space<vmem>>, %arg4: memref<8x128xf32, #tpu.memory_space<vmem>>) attributes {dimension_semantics = [#tpu.dimension_semantics<parallel>], iteration_bounds = array<i64: 1>, scalar_prefetch = 0 : i64, scratch_operands = 0 : i64, tpu.core_type = #tpu.core_type<tc>, window_params = [{transform_indices = @transform_0, window_bounds = array<i64: 8, 128>}, {pipeline_mode = #tpu.pipeline_mode<synchronous>, transform_indices = @transform_1, window_bounds = array<i64: 128, 128>}, {pipeline_mode = #tpu.pipeline_mode<synchronous>, transform_indices = @transform_2, window_bounds = array<i64: 1, 128>}, {transform_indices = @transform_3, window_bounds = array<i64: 8, 128>}]} {
    %c0 = arith.constant 0 : index
    %c0_0 = arith.constant 0 : index
    %0 = vector.load %arg1[%c0, %c0_0] : memref<8x128xf32, #tpu.memory_space<vmem>>, vector<8x128xf32>
    %c0_1 = arith.constant 0 : index
    %c0_2 = arith.constant 0 : index
    %1 = vector.load %arg2[%c0_1, %c0_2] : memref<128x128xf32, #tpu.memory_space<vmem>>, vector<128x128xf32>
    %cst = arith.constant dense<0.000000e+00> : vector<8x128xf32>
    %2 = tpu.matmul %0, %1, %cst {dimension_numbers = #tpu.dot_dimension_numbers<[1], [0], [0], [1], [0, 0, 1, 1], [], []>} : vector<8x128xf32>, vector<128x128xf32>, vector<8x128xf32> -> vector<8x128xf32>
    %c0_3 = arith.constant 0 : index
    %c0_4 = arith.constant 0 : index
    %3 = vector.load %arg3[%c0_3, %c0_4] : memref<1x128xf32, #tpu.memory_space<vmem>>, vector<1x128xf32>
    %4 = vector.broadcast %3 : vector<1x128xf32> to vector<8x128xf32>
    %5 = arith.addf %2, %4 : vector<8x128xf32>
    %c0_5 = arith.constant 0 : index
    %c0_6 = arith.constant 0 : index
    %6 = vector.load %arg4[%c0_5, %c0_6] : memref<8x128xf32, #tpu.memory_space<vmem>>, vector<8x128xf32>
    tpu.vector_store %arg4[%c0_5, %c0_6], %5 {strides = array<i32>} : memref<8x128xf32, #tpu.memory_space<vmem>>, vector<8x128xf32>,
    return
  }
  func.func @transform_0(%arg0: i32) -> (i32, i32) {
    %c0_i32 = arith.constant 0 : i32
    %c0_i32_0 = arith.constant 0 : i32
    return %arg0, %c0_i32 : i32, i32
  }
  func.func @transform_1(%arg0: i32) -> (i32, i32) {
    %c0_i32 = arith.constant 0 : i32
    %c0_i32_0 = arith.constant 0 : i32
    %c0_i32_1 = arith.constant 0 : i32
    return %c0_i32, %c0_i32_0 : i32, i32
  }
  func.func @transform_2(%arg0: i32) -> (i32, i32) {
    %c0_i32 = arith.constant 0 : i32
    %c0_i32_0 = arith.constant 0 : i32
    %c0_i32_1 = arith.constant 0 : i32
    return %c0_i32, %c0_i32_0 : i32, i32
  }
  func.func @transform_3(%arg0: i32) -> (i32, i32) {
    %c0_i32 = arith.constant 0 : i32
    %c0_i32_0 = arith.constant 0 : i32
    return %arg0, %c0_i32 : i32, i32
  }
}

module attributes {stable_mosaic.version = 11 : i64} {
  func.func @_flash_attn_kernel(%arg0: i32, %arg1: i32, %arg2: memref<8x128xf32, #tpu.memory_space<vmem>>, %arg3: memref<8x128xf32, #tpu.memory_space<vmem>>, %arg4: memref<8x128xf32, #tpu.memory_space<vmem>>, %arg5: memref<8x128xf32, #tpu.memory_space<vmem>>, %arg6: memref<8x1xf32, #tpu.memory_space<vmem>>, %arg7: memref<8x1xf32, #tpu.memory_space<vmem>>, %arg8: memref<8x128xf32, #tpu.memory_space<vmem>>) attributes {dimension_semantics = [#tpu.dimension_semantics<parallel>, #tpu.dimension_semantics<arbitrary>], iteration_bounds = array<i64: 1, 1>, scalar_prefetch = 0 : i64, scratch_operands = 3 : i64, tpu.core_type = #tpu.core_type<tc>, window_params = [{transform_indices = @transform_0, window_bounds = array<i64: 8, 128>}, {transform_indices = @transform_1, window_bounds = array<i64: 8, 128>}, {transform_indices = @transform_2, window_bounds = array<i64: 8, 128>}, {transform_indices = @transform_3, window_bounds = array<i64: 8, 128>}]} {
    %c0_i32 = arith.constant 0 : i32
    %0 = arith.cmpi eq, %arg1, %c0_i32 : i32
    %1 = arith.extui %0 : i1 to i32
    %c0_i32_0 = arith.constant 0 : i32
    %2 = arith.cmpi ne, %1, %c0_i32_0 : i32
    scf.if %2 {
      %cst_25 = arith.constant 0xFF800000 : f32
      %40 = vector.broadcast %cst_25 : f32 to vector<8x1xf32>
      %c0_26 = arith.constant 0 : index
      %c0_27 = arith.constant 0 : index
      %41 = vector.load %arg6[%c0_26, %c0_27] : memref<8x1xf32, #tpu.memory_space<vmem>>, vector<8x1xf32>
      tpu.vector_store %arg6[%c0_26, %c0_27], %40 {strides = array<i32>} : memref<8x1xf32, #tpu.memory_space<vmem>>, vector<8x1xf32>,
      %cst_28 = arith.constant 0.000000e+00 : f32
      %42 = vector.broadcast %cst_28 : f32 to vector<8x1xf32>
      %c0_29 = arith.constant 0 : index
      %c0_30 = arith.constant 0 : index
      %43 = vector.load %arg7[%c0_29, %c0_30] : memref<8x1xf32, #tpu.memory_space<vmem>>, vector<8x1xf32>
      tpu.vector_store %arg7[%c0_29, %c0_30], %42 {strides = array<i32>} : memref<8x1xf32, #tpu.memory_space<vmem>>, vector<8x1xf32>,
      %cst_31 = arith.constant 0.000000e+00 : f32
      %44 = vector.broadcast %cst_31 : f32 to vector<8x128xf32>
      %c0_32 = arith.constant 0 : index
      %c0_33 = arith.constant 0 : index
      %45 = vector.load %arg8[%c0_32, %c0_33] : memref<8x128xf32, #tpu.memory_space<vmem>>, vector<8x128xf32>
      tpu.vector_store %arg8[%c0_32, %c0_33], %44 {strides = array<i32>} : memref<8x128xf32, #tpu.memory_space<vmem>>, vector<8x128xf32>,
    } else {
    }
    %c0 = arith.constant 0 : index
    %c0_1 = arith.constant 0 : index
    %3 = vector.load %arg2[%c0, %c0_1] : memref<8x128xf32, #tpu.memory_space<vmem>>, vector<8x128xf32>
    %c0_2 = arith.constant 0 : index
    %c0_3 = arith.constant 0 : index
    %4 = vector.load %arg3[%c0_2, %c0_3] : memref<8x128xf32, #tpu.memory_space<vmem>>, vector<8x128xf32>
    %cst = arith.constant dense<0.000000e+00> : vector<8x8xf32>
    %5 = tpu.matmul %3, %4, %cst {dimension_numbers = #tpu.dot_dimension_numbers<[1], [1], [0], [0], [0, 0, 1, 0], [], []>} : vector<8x128xf32>, vector<8x128xf32>, vector<8x8xf32> -> vector<8x8xf32>
    %c8_i32 = arith.constant 8 : i32
    %6 = arith.muli %arg1, %c8_i32 : i32
    %7 = tpu.iota {dimensions = array<i32: 1>} : vector<8x8xi32>
    %8 = vector.broadcast %6 : i32 to vector<8x8xi32>
    %9 = arith.addi %8, %7 : vector<8x8xi32>
    %c8_i32_4 = arith.constant 8 : i32
    %10 = vector.broadcast %c8_i32_4 : i32 to vector<8x8xi32>
    %11 = arith.cmpi slt, %9, %10 : vector<8x8xi32>
    %cst_5 = arith.constant -1.000000e+30 : f32
    %12 = vector.broadcast %cst_5 : f32 to vector<8x8xf32>
    %13 = arith.select %11, %5, %12 : vector<8x8xi1>, vector<8x8xf32>
    %c0_6 = arith.constant 0 : index
    %c0_7 = arith.constant 0 : index
    %14 = vector.load %arg6[%c0_6, %c0_7] : memref<8x1xf32, #tpu.memory_space<vmem>>, vector<8x1xf32>
    %cst_8 = arith.constant dense<0xFF800000> : vector<8xf32>
    %15 = vector.multi_reduction <maximumf>, %13, %cst_8 [1] : vector<8x8xf32> to vector<8xf32>
    %16 = vector.shape_cast %15 : vector<8xf32> to vector<8x1xf32>
    %17 = arith.maximumf %14, %16 : vector<8x1xf32>
    %18 = arith.subf %14, %17 : vector<8x1xf32>
    %19 = math.exp %18 : vector<8x1xf32>
    %20 = vector.broadcast %17 : vector<8x1xf32> to vector<8x8xf32>
    %21 = arith.subf %13, %20 : vector<8x8xf32>
    %22 = math.exp %21 : vector<8x8xf32>
    %c0_9 = arith.constant 0 : index
    %c0_10 = arith.constant 0 : index
    %23 = vector.load %arg7[%c0_9, %c0_10] : memref<8x1xf32, #tpu.memory_space<vmem>>, vector<8x1xf32>
    %24 = arith.mulf %19, %23 : vector<8x1xf32>
    %cst_11 = arith.constant dense<0.000000e+00> : vector<8xf32>
    %25 = vector.multi_reduction <add>, %22, %cst_11 [1] : vector<8x8xf32> to vector<8xf32>
    %26 = vector.shape_cast %25 : vector<8xf32> to vector<8x1xf32>
    %27 = arith.addf %24, %26 : vector<8x1xf32>
    %c0_12 = arith.constant 0 : index
    %c0_13 = arith.constant 0 : index
    %28 = vector.load %arg7[%c0_12, %c0_13] : memref<8x1xf32, #tpu.memory_space<vmem>>, vector<8x1xf32>
    tpu.vector_store %arg7[%c0_12, %c0_13], %27 {strides = array<i32>} : memref<8x1xf32, #tpu.memory_space<vmem>>, vector<8x1xf32>,
    %c0_14 = arith.constant 0 : index
    %c0_15 = arith.constant 0 : index
    %29 = vector.load %arg8[%c0_14, %c0_15] : memref<8x128xf32, #tpu.memory_space<vmem>>, vector<8x128xf32>
    %30 = vector.broadcast %19 : vector<8x1xf32> to vector<8x128xf32>
    %31 = arith.mulf %30, %29 : vector<8x128xf32>
    %c0_16 = arith.constant 0 : index
    %c0_17 = arith.constant 0 : index
    %32 = vector.load %arg4[%c0_16, %c0_17] : memref<8x128xf32, #tpu.memory_space<vmem>>, vector<8x128xf32>
    %cst_18 = arith.constant dense<0.000000e+00> : vector<8x128xf32>
    %33 = tpu.matmul %22, %32, %cst_18 {dimension_numbers = #tpu.dot_dimension_numbers<[1], [0], [0], [1], [0, 0, 1, 1], [], []>} : vector<8x8xf32>, vector<8x128xf32>, vector<8x128xf32> -> vector<8x128xf32>
    %34 = arith.addf %31, %33 : vector<8x128xf32>
    %c0_19 = arith.constant 0 : index
    %c0_20 = arith.constant 0 : index
    %35 = vector.load %arg8[%c0_19, %c0_20] : memref<8x128xf32, #tpu.memory_space<vmem>>, vector<8x128xf32>
    tpu.vector_store %arg8[%c0_19, %c0_20], %34 {strides = array<i32>} : memref<8x128xf32, #tpu.memory_space<vmem>>, vector<8x128xf32>,
    %c0_21 = arith.constant 0 : index
    %c0_22 = arith.constant 0 : index
    %36 = vector.load %arg6[%c0_21, %c0_22] : memref<8x1xf32, #tpu.memory_space<vmem>>, vector<8x1xf32>
    tpu.vector_store %arg6[%c0_21, %c0_22], %17 {strides = array<i32>} : memref<8x1xf32, #tpu.memory_space<vmem>>, vector<8x1xf32>,
    %c0_i32_23 = arith.constant 0 : i32
    %37 = arith.cmpi eq, %arg1, %c0_i32_23 : i32
    %38 = arith.extui %37 : i1 to i32
    %c0_i32_24 = arith.constant 0 : i32
    %39 = arith.cmpi ne, %38, %c0_i32_24 : i32
    scf.if %39 {
      %c0_25 = arith.constant 0 : index
      %c0_26 = arith.constant 0 : index
      %40 = vector.load %arg7[%c0_25, %c0_26] : memref<8x1xf32, #tpu.memory_space<vmem>>, vector<8x1xf32>
      %41 = tpu.reciprocal %40 {approx = true} : vector<8x1xf32> -> vector<8x1xf32>
      %c0_27 = arith.constant 0 : index
      %c0_28 = arith.constant 0 : index
      %42 = vector.load %arg8[%c0_27, %c0_28] : memref<8x128xf32, #tpu.memory_space<vmem>>, vector<8x128xf32>
      %43 = vector.broadcast %41 : vector<8x1xf32> to vector<8x128xf32>
      %44 = arith.mulf %42, %43 : vector<8x128xf32>
      %c0_29 = arith.constant 0 : index
      %c0_30 = arith.constant 0 : index
      %45 = vector.load %arg5[%c0_29, %c0_30] : memref<8x128xf32, #tpu.memory_space<vmem>>, vector<8x128xf32>
      tpu.vector_store %arg5[%c0_29, %c0_30], %44 {strides = array<i32>} : memref<8x128xf32, #tpu.memory_space<vmem>>, vector<8x128xf32>,
    } else {
    }
    return
  }
  func.func @transform_0(%arg0: i32, %arg1: i32) -> (i32, i32) {
    %c0_i32 = arith.constant 0 : i32
    %c0_i32_0 = arith.constant 0 : i32
    return %arg0, %c0_i32 : i32, i32
  }
  func.func @transform_1(%arg0: i32, %arg1: i32) -> (i32, i32) {
    %c0_i32 = arith.constant 0 : i32
    %c0_i32_0 = arith.constant 0 : i32
    return %arg1, %c0_i32 : i32, i32
  }
  func.func @transform_2(%arg0: i32, %arg1: i32) -> (i32, i32) {
    %c0_i32 = arith.constant 0 : i32
    %c0_i32_0 = arith.constant 0 : i32
    return %arg1, %c0_i32 : i32, i32
  }
  func.func @transform_3(%arg0: i32, %arg1: i32) -> (i32, i32) {
    %c0_i32 = arith.constant 0 : i32
    %c0_i32_0 = arith.constant 0 : i32
    return %arg0, %c0_i32 : i32, i32
  }
}

</mosaic_0001>

<llo_original>
// kernel: single_head_attention.4
$region0: #{single_head_attention.4}
  #allocation0 [shape = 'u32[]', space=smem, size = 0x4, offset = 0x4, fixed_abs, tag = 'smem constant byte address 0x4 - core index']
  #allocation1 [shape = 'u32[72,128]{1,0:T(1,128)}', space=vmem, size = 0x9000, scoped, tag = 'internal scratch']
  %s0 = inlined_call_operand.vmem [shape: f32[8,128], index: 0, kind: input, shape index: {}]
  %s1 = inlined_call_operand.vmem [shape: f32[128,128], index: 1, kind: input, shape index: {}]
  %s2 = inlined_call_operand.vmem [shape: f32[1,128], index: 2, kind: input, shape index: {}]
  %s3 = inlined_call_operand.vmem [shape: f32[8,128], index: 3, kind: output, shape index: {}]
  %s4 = sld [smem:[#allocation0]]
  $region22: #{single_head_attention.4} parent=0
    _
  %s6 = ssub.s32 1, %s4
  %s7 = scalar_select 0, %s6, %s4
  // Predicated region
  $region2: #{single_head_attention.4} parent=0 // pred_check
    _
  $region3: #{single_head_attention.4} parent=0 // pred_check_branch
    %9 = sbr.rel (0) target = $region5
  $region4: #{single_head_attention.4} parent=0 // pred_region
    _
  $region5: #{single_head_attention.4} parent=0 // pred_fallthru
    _
  // Predicated region
  $region6: #{single_head_attention.4} parent=0 // pred_check
    _
  $region7: #{single_head_attention.4} parent=0 // pred_check_branch
    %11 = sbr.rel (0) target = $region9
  $region8: #{single_head_attention.4} parent=0 // pred_region
    _
  $region9: #{single_head_attention.4} parent=0 // pred_fallthru
    _
  // Predicated region
  $region10: #{single_head_attention.4} parent=0 // pred_check
    _
  $region11: #{single_head_attention.4} parent=0 // pred_check_branch
    %13 = sbr.rel (0) target = $region13
  $region12: #{single_head_attention.4} parent=0 // pred_region
    _
  $region13: #{single_head_attention.4} parent=0 // pred_fallthru
    _
  %v14 = vld [vmem:[%s0] sm:$0xff]
  %v15 = vld [vmem:[%s1] sm:$0xff]
  %v16 = vld [vmem:[%s1 + $0x8] sm:$0xff]
  %v17 = vld [vmem:[%s1 + $0x10] sm:$0xff]
  %v18 = vld [vmem:[%s1 + $0x18] sm:$0xff]
  %v19 = vld [vmem:[%s1 + $0x20] sm:$0xff]
  %v20 = vld [vmem:[%s1 + $0x28] sm:$0xff]
  %v21 = vld [vmem:[%s1 + $0x30] sm:$0xff]
  %v22 = vld [vmem:[%s1 + $0x38] sm:$0xff]
  %v23 = vld [vmem:[%s1 + $0x40] sm:$0xff]
  %v24 = vld [vmem:[%s1 + $0x48] sm:$0xff]
  %v25 = vld [vmem:[%s1 + $0x50] sm:$0xff]
  %v26 = vld [vmem:[%s1 + $0x58] sm:$0xff]
  %v27 = vld [vmem:[%s1 + $0x60] sm:$0xff]
  %v28 = vld [vmem:[%s1 + $0x68] sm:$0xff]
  %v29 = vld [vmem:[%s1 + $0x70] sm:$0xff]
  %v30 = vld [vmem:[%s1 + $0x78] sm:$0xff]
  %v31 = vld [vmem:[%s2] sm:$0x1]
  %v33 = vperm.slane %v31, 0
  %35 = vmatpush.msra.mxu0 %v30
  %36 = vmatpush.msra.mxu0 %v29
  %37 = vmatpush.msra.mxu0 %v28
  %38 = vmatpush.msra.mxu0 %v27
  %39 = vmatpush.msra.mxu0 %v26
  %40 = vmatpush.msra.mxu0 %v25
  %41 = vmatpush.msra.mxu0 %v24
  %42 = vmatpush.msra.mxu0 %v23
  %43 = vmatpush.msra.mxu0 %v22
  %44 = vmatpush.msra.mxu0 %v21
  %45 = vmatpush.msra.mxu0 %v20
  %46 = vmatpush.msra.mxu0 %v19
  %47 = vmatpush.msra.mxu0 %v18
  %48 = vmatpush.msra.mxu0 %v17
  %49 = vmatpush.msra.mxu0 %v16
  %50 = vmatpush.msra.mxu0 %v15
  %51 = vmatmul.f32.gmra.mxu0 %v14
  %v52 = vpop.f32.mrf.mxu0
  %v53 = vadd.f32 %v33, %v52
  %54 = vdwg.mxu0
  %55 = vst [vmem:[%s3] sm:$0xff] %v53
  // Predicated region
  $region14: #{single_head_attention.4} parent=0 // pred_check
    _
  $region15: #{single_head_attention.4} parent=0 // pred_check_branch
    %57 = sbr.rel (0) target = $region17
  $region16: #{single_head_attention.4} parent=0 // pred_region
    _
  $region17: #{single_head_attention.4} parent=0 // pred_fallthru
    _
  // Predicated region
  $region18: #{single_head_attention.4} parent=0 // pred_check
    _
  $region19: #{single_head_attention.4} parent=0 // pred_check_branch
    %59 = sbr.rel (0) target = $region21
  $region20: #{single_head_attention.4} parent=0 // pred_region
    _
  $region21: #{single_head_attention.4} parent=0 // pred_fallthru
    _

// kernel: single_head_attention.7
$region0: #{single_head_attention.7}
  #allocation0 [shape = 'u32[]', space=smem, size = 0x4, offset = 0x4, fixed_abs, tag = 'smem constant byte address 0x4 - core index']
  #allocation1 [shape = 'u32[72,128]{1,0:T(1,128)}', space=vmem, size = 0x9000, scoped, tag = 'internal scratch']
  #allocation2 [shape = 'f32[8,1]{1,0:T(8,128)}', space=vmem, size = 0x1000, scoped, tag = 'scratch operand']
  #allocation3 [shape = 'f32[8,1]{1,0:T(8,128)}', space=vmem, size = 0x1000, scoped, tag = 'scratch operand']
  #allocation4 [shape = 'f32[8,128]{1,0:T(8,128)}', space=vmem, size = 0x1000, scoped, tag = 'scratch operand']
  %s0 = inlined_call_operand.vmem [shape: f32[8,128], index: 0, kind: input, shape index: {}]
  %s1 = inlined_call_operand.vmem [shape: f32[8,128], index: 1, kind: input, shape index: {}]
  %s2 = inlined_call_operand.vmem [shape: f32[8,128], index: 2, kind: input, shape index: {}]
  %s3 = inlined_call_operand.hbm [shape: f32[8,128], index: 3, kind: output, shape index: {}]
  %s4 = sld [smem:[#allocation0]]
  $region30: #{single_head_attention.7} parent=0
    _
  %s6 = ssub.s32 1, %s4
  %s7 = scalar_select 0, %s6, %s4
  $region1: #{single_head_attention.7} parent=0
    #allocation5 [shape = 'u8[4096]{0}', space=vmem, size = 0x1000, scoped, tag = 'output window, operand 0, single buffered']
    #allocation6 [shape = 's32[1]{0}', space=sflag, size = 0x4, scoped, tag = 'scoped memory for single_head_attention.7']
    %8 = vsyncpa [#allocation6], 0
    // Predicated region
    $region2: #{single_head_attention.7} parent=1 // pred_check
      _
    $region3: #{single_head_attention.7} parent=1 // pred_check_branch
      %10 = sbr.rel (0) target = $region5
    $region4: #{single_head_attention.7} parent=1 // pred_region
      _
    $region5: #{single_head_attention.7} parent=1 // pred_fallthru
      _
    // Predicated region
    $region6: #{single_head_attention.7} parent=1 // pred_check
      _
    $region7: #{single_head_attention.7} parent=1 // pred_check_branch
      %12 = sbr.rel (0) target = $region9
    $region8: #{single_head_attention.7} parent=1 // pred_region
      _
    $region9: #{single_head_attention.7} parent=1 // pred_fallthru
      _
    // Predicated region
    $region10: #{single_head_attention.7} parent=1 // pred_check
      _
    $region11: #{single_head_attention.7} parent=1 // pred_check_branch
      %14 = sbr.rel (0) target = $region13
    $region12: #{single_head_attention.7} parent=1 // pred_region
      _
    $region13: #{single_head_attention.7} parent=1 // pred_fallthru
      _
    %p15 = scmp.eq.s32.totalorder 0, 0
    // Predicated region
    $region14: #{single_head_attention.7} parent=1 // pred_check
      %p16 = pneg %p15
    $region15: #{single_head_attention.7} parent=1 // pred_check_branch
      %18 = sbr.rel (%p16) target = $region17
    $region16: #{single_head_attention.7} parent=1 // pred_region
      %vm19 = vcmask 7168
      %20 = vst.msk [vmem:[#allocation2] sm:$0xff] %vm19, -inf
      %21 = vst.msk [vmem:[#allocation3] sm:$0xff] %vm19, 0.0
      %22 = vst [vmem:[#allocation4] sm:$0xff] 0.0
    $region17: #{single_head_attention.7} parent=1 // pred_fallthru
      _
    %v23 = vld [vmem:[%s0] sm:$0xff]
    %v24 = vld [vmem:[%s1] sm:$0xff]
    %25 = vmatpush.xpose.msra.mxu0 0.0
    %26 = vmatpush.xpose.msra.mxu0 0.0
    %27 = vmatpush.xpose.msra.mxu0 0.0
    %28 = vmatpush.xpose.msra.mxu0 0.0
    %29 = vmatpush.xpose.msra.mxu0 0.0
    %30 = vmatpush.xpose.msra.mxu0 0.0
    %31 = vmatpush.xpose.msra.mxu0 0.0
    %32 = vmatpush.xpose.msra.mxu0 0.0
    %33 = vmatpush.xpose.msra.mxu0 0.0
    %34 = vmatpush.xpose.msra.mxu0 0.0
    %35 = vmatpush.xpose.msra.mxu0 0.0
    %36 = vmatpush.xpose.msra.mxu0 0.0
    %37 = vmatpush.xpose.msra.mxu0 0.0
    %38 = vmatpush.xpose.msra.mxu0 0.0
    %39 = vmatpush.xpose.msra.mxu0 0.0
    %40 = vmatpush.xpose.msra.mxu0 %v24
    %41 = vmatmul.f32.gmra.mxu0 %v23
    %v42 = vpop.f32.mrf.mxu0
    %v43 = vadd.f32 0.0, %v42
    %44 = vdwg.mxu0
    %s45 = smul.u32 0, 8
    %v46 = vlaneseq
    %v47 = vand.u32 %v46, 127
    %v48 = vstv %s45
    %v49 = vadd.s32 %v48, %v47
    %vm50 = vcmp.lt.s32.totalorder %v49, 8
    %v51 = vsel %vm50, %v43, -1e+30
    %v52 = vld [vmem:[#allocation2] sm:$0xff]
    %vm53 = vcmask 64512
    %v54 = vsel %vm53, %v51, -inf
    %55 = vmax.xlane.f32.xlu0 %v54
    %v56 = vpop.xlane.xlu0 %55
    %v57 = vmax.f32 %v52, %v56
    %v58 = vsub.f32 %v52, %v57
    %v59 = vmul.f32 %v58, 1.442695
    %v60 = vpow.pop %v59
    %62 = vset.pattern.permute.xlu0 0
    %63 = vperm.xlu0 %62, %v57
    %v64 = vpop.permute.xlu0 %63
    %v66 = vsub.f32 %v51, %v64
    %v67 = vmul.f32 %v66, 1.442695
    %v68 = vpow.pop %v67
    %v69 = vld [vmem:[#allocation3] sm:$0xff]
    %v70 = vmul.f32 %v60, %v69
    %v71 = vsel %vm53, %v68, 0.0
    %72 = vadd.xlane.f32.xlu0 %v71
    %v73 = vpop.xlane.xlu0 %72
    %v74 = vadd.f32 %v70, %v73
    %vm75 = vcmask 7168
    %76 = vst.msk [vmem:[#allocation3] sm:$0xff] %vm75, %v74
    %v77 = vld [vmem:[#allocation4] sm:$0xff]
    %79 = vset.pattern.permute.xlu0 0
    %80 = vperm.xlu0 %79, %v60
    %v81 = vpop.permute.xlu0 %80
    %v83 = vmul.f32 %v81, %v77
    %v84 = vld [vmem:[%s2] sm:$0xff]
    %v86 = vsel %vm53, %v68, 0
    %88 = vmatpush.msra.mxu0 0.0
    %89 = vmatpush.msra.mxu0 0.0
    %90 = vmatpush.msra.mxu0 0.0
    %91 = vmatpush.msra.mxu0 0.0
    %92 = vmatpush.msra.mxu0 0.0
    %93 = vmatpush.msra.mxu0 0.0
    %94 = vmatpush.msra.mxu0 0.0
    %95 = vmatpush.msra.mxu0 0.0
    %96 = vmatpush.msra.mxu0 0.0
    %97 = vmatpush.msra.mxu0 0.0
    %98 = vmatpush.msra.mxu0 0.0
    %99 = vmatpush.msra.mxu0 0.0
    %100 = vmatpush.msra.mxu0 0.0
    %101 = vmatpush.msra.mxu0 0.0
    %102 = vmatpush.msra.mxu0 0.0
    %103 = vmatpush.msra.mxu0 %v84
    %104 = vmatmul.f32.gmra.mxu0 %v86
    %v105 = vpop.f32.mrf.mxu0
    %v106 = vadd.f32 0.0, %v105
    %107 = vdwg.mxu0
    %v108 = vadd.f32 %v83, %v106
    %109 = vst [vmem:[#allocation4] sm:$0xff] %v108
    %110 = vst.msk [vmem:[#allocation2] sm:$0xff] %vm75, %v57
    // Predicated region
    $region18: #{single_head_attention.7} parent=1 // pred_check
      %p111 = pneg %p15
    $region19: #{single_head_attention.7} parent=1 // pred_check_branch
      %113 = sbr.rel (%p111) target = $region21
    $region20: #{single_head_attention.7} parent=1 // pred_region
      %v114 = vld [vmem:[#allocation3] sm:$0xff]
      %v115 = vrcp.pop %v114
      %v116 = vld [vmem:[#allocation4] sm:$0xff]
      %118 = vset.pattern.permute.xlu0 0
      %119 = vperm.xlu0 %118, %v115
      %v120 = vpop.permute.xlu0 %119
      %v122 = vmul.f32 %v116, %v120
      %123 = vst [vmem:[#allocation5] sm:$0xff] %v122
    $region21: #{single_head_attention.7} parent=1 // pred_fallthru
      _
    // Predicated region
    $region22: #{single_head_attention.7} parent=1 // pred_check
      _
    $region23: #{single_head_attention.7} parent=1 // pred_check_branch
      %125 = sbr.rel (0) target = $region25
    $region24: #{single_head_attention.7} parent=1 // pred_region
      %127 = vsyncadd [#allocation6], 0
      %s129 = sshll.u32 [#allocation5], 4
      %s130 = int_to_ptr.vmem [resolvable:$true] %s129
      %s131 = sshll.u32 %s3, 4
      %s132 = int_to_ptr.hbm [resolvable:$true] %s131
      %134 = dma.vmem_to_hbm [thread:$0]  %s130, 128, %s132, [#allocation6]
    $region25: #{single_head_attention.7} parent=1 // pred_fallthru
      _
    // Predicated region
    $region26: #{single_head_attention.7} parent=1 // pred_check
      _
    $region27: #{single_head_attention.7} parent=1 // pred_check_branch
      %136 = sbr.rel (0) target = $region29
    $region28: #{single_head_attention.7} parent=1 // pred_region
      %138 = dma.done [#allocation6], 128
    $region29: #{single_head_attention.7} parent=1 // pred_fallthru
      _
    %139 = vsyncpa [#allocation6], 1

</llo_original>
